<compile_context>
chip_gen: v6e
topology: v6e:2x2x1
jax: 0.10.0
libtpu: 0.0.40
codegen_flags: <defaults>
</compile_context>

<pallas_src>
import string

import jax
import jax.numpy as jnp
from jax import lax
from jax.experimental import pallas as pl
from jax.experimental.pallas import tpu as pltpu


def gru_seq_kernel(idx_ref, h0_ref, wi_ref, wh_ref, bih_ref, bhh_ref,
                   wlin_ref, blin_ref, logp_ref, hn_ref, hseq_ref):
    seq_len = hseq_ref.shape[0]
    hs = h0_ref.shape[-1]

    def step(t, h):
        # Input-side projection = one row of W_ih (one-hot input) + bias.
        ci = idx_ref[t]
        gi = wi_ref[pl.ds(ci, 1), :] + bih_ref[...]               # (1, 3H) f32
        # Recurrent projection: bf16 operands, f32 MXU accumulation.
        gh = (jnp.dot(h.astype(jnp.bfloat16), wh_ref[...],
                      preferred_element_type=jnp.float32)
              + bhh_ref[...])                                     # (1, 3H) f32

        r = jax.nn.sigmoid(gi[:, 0:hs] + gh[:, 0:hs])
        z = jax.nn.sigmoid(gi[:, hs:2 * hs] + gh[:, hs:2 * hs])
        n = jnp.tanh(gi[:, 2 * hs:3 * hs] + r * gh[:, 2 * hs:3 * hs])
        h_new = (1.0 - z) * n + z * h                             # f32

        # Stash h_t for the post-loop classifier; never read inside the loop,
        # so this store sits off the serialized recurrent dependency chain.
        hseq_ref[pl.ds(t, 1), :] = h_new
        return h_new

    unroll = max(1, min(4, seq_len))
    h_final = lax.fori_loop(0, seq_len, step, h0_ref[...], unroll=unroll)
    hn_ref[...] = h_final

    # Classifier head + log-softmax for ALL timesteps in one MXU matmul and a
    # single lane-dense unmasked store.  Pad lanes of b_lin hold -1e30 so they
    # never win the max and contribute ~0 to the sum (do NOT use -inf).
    logits = (jnp.dot(hseq_ref[...].astype(jnp.bfloat16), wlin_ref[...],
                      preferred_element_type=jnp.float32)
              + blin_ref[...])                                    # (T, OUTP)
    m = jnp.max(logits, axis=-1, keepdims=True)
    shifted = logits - m
    lse = jnp.log(jnp.sum(jnp.exp(shifted), axis=-1, keepdims=True))
    logp_ref[...] = shifted - lse


def gru_forward(x, hidden, params):
    """x: (seq, input_size) one-hot rows (seq=1 reproduces the PyTorch module's
    forward(input, hidden) with input of shape (1, input_size)).
    hidden: (1, 1, hidden_size).
    Returns (log_probs (seq, 1, output_size), hn (1, 1, hidden_size))."""
    seq_len = x.shape[0]
    hidden_size = params['w_h'].shape[0]
    out_pad = params['w_lin'].shape[1]
    output_size = params['output_size']

    # Exploit the one-hot structure: only the character index is needed.
    idx = jnp.argmax(jnp.asarray(x, jnp.float32), axis=-1).astype(jnp.int32)
    h2d = jnp.asarray(hidden, jnp.float32).reshape(1, hidden_size)

    vmem = pl.BlockSpec(memory_space=pltpu.MemorySpace.VMEM)
    smem = pl.BlockSpec(memory_space=pltpu.MemorySpace.SMEM)

    # NOTE: h0 could be aliased to hn via input_output_aliases when chaining
    # hidden state across calls; left off so the caller's h0 is not donated.
    logp, hn = pl.pallas_call(
        gru_seq_kernel,
        out_shape=(
            jax.ShapeDtypeStruct((seq_len, out_pad), jnp.float32),
            jax.ShapeDtypeStruct((1, hidden_size), jnp.float32),
        ),
        in_specs=[smem] + [vmem] * 7,
        out_specs=(vmem, vmem),
        scratch_shapes=[
            pltpu.VMEM((seq_len, hidden_size), jnp.float32),   # h_t history
        ],
    )(idx, h2d, params['w_i'], params['w_h'], params['b_ih'], params['b_hh'],
      params['w_lin'], params['b_lin'])

    log_probs = logp[:, :output_size].reshape(seq_len, 1, output_size)
    return log_probs, hn.reshape(1, 1, hidden_size)


def init_params(key, input_size, hidden_size, output_size, lane=128, sublane=8):
    """Deterministic init mimicking PyTorch U(-1/sqrt(H), 1/sqrt(H)).
    GRU weights stored pre-transposed with gates stacked [r | z | n] along the
    output dim.  w_i is row-padded and kept f32 (it is gathered, not matmul'd);
    w_h / w_lin are stored bf16 (MXU operands); classifier lane-padded to 128."""
    ks = jax.random.split(key, 6)
    bound = 1.0 / jnp.sqrt(hidden_size)
    w_i = jax.random.uniform(ks[0], (input_size, 3 * hidden_size), jnp.float32, -bound, bound)
    w_h = jax.random.uniform(ks[1], (hidden_size, 3 * hidden_size), jnp.float32, -bound, bound)
    b_ih = jax.random.uniform(ks[2], (1, 3 * hidden_size), jnp.float32, -bound, bound)
    b_hh = jax.random.uniform(ks[3], (1, 3 * hidden_size), jnp.float32, -bound, bound)
    w_lin = jax.random.uniform(ks[4], (hidden_size, output_size), jnp.float32, -bound, bound)
    b_lin = jax.random.uniform(ks[5], (output_size,), jnp.float32, -bound, bound)

    in_pad = ((input_size + sublane - 1) // sublane) * sublane
    w_i_p = jnp.zeros((in_pad, 3 * hidden_size), jnp.float32).at[:input_size].set(w_i)

    out_pad = ((output_size + lane - 1) // lane) * lane
    w_lin_p = jnp.zeros((hidden_size, out_pad), jnp.float32).at[:, :output_size].set(w_lin)
    b_lin_p = jnp.full((1, out_pad), -1e30, jnp.float32).at[0, :output_size].set(b_lin)

    return dict(w_i=w_i_p,
                w_h=w_h.astype(jnp.bfloat16),
                b_ih=b_ih, b_hh=b_hh,
                w_lin=w_lin_p.astype(jnp.bfloat16),
                b_lin=b_lin_p,
                output_size=output_size)


if __name__ == "__main__":
    all_letters = string.ascii_letters + " .,;'"
    input_size = len(all_letters)   # 57 (n_letters)
    hidden_size = 128               # n_hidden
    # n_categories is 0 in the snippet (all_categories is empty) -> degenerate;
    # use the classic 18-category name-classification count instead.
    output_size = 18

    key = jax.random.PRNGKey(0)
    k_params, _ = jax.random.split(key)
    params = init_params(k_params, input_size, hidden_size, output_size)

    # lineToTensor('Bai') -> (3, 1, 57) one-hot; drop the batch dim -> (3, 57).
    line = 'Bai'
    char_idx = [all_letters.find(ch) for ch in line]
    x = jnp.zeros((len(line), input_size), jnp.float32)
    for i, ci in enumerate(char_idx):
        x = x.at[i, ci].set(1.0)
    hidden0 = jnp.zeros((1, 1, hidden_size), jnp.float32)

    log_probs, hn = gru_forward(x, hidden0, params)
    jax.block_until_ready((log_probs, hn))

    # Pure-JAX reference (PyTorch nn.GRU semantics, gate order [r, z, n]),
    # using the same bf16-operand / f32-accumulation recipe as the kernel.
    H = hidden_size
    w_i, w_h = params['w_i'], params['w_h']
    b_ih, b_hh = params['b_ih'], params['b_hh']
    w_lin, b_lin = params['w_lin'], params['b_lin']
    h = hidden0.reshape(1, H)
    ref_logp, ref_h = [], []
    for t in range(len(line)):
        gi = w_i[char_idx[t]:char_idx[t] + 1] + b_ih
        gh = jnp.dot(h.astype(jnp.bfloat16), w_h,
                     preferred_element_type=jnp.float32) + b_hh
        r = jax.nn.sigmoid(gi[:, :H] + gh[:, :H])
        z = jax.nn.sigmoid(gi[:, H:2 * H] + gh[:, H:2 * H])
        n = jnp.tanh(gi[:, 2 * H:] + r * gh[:, 2 * H:])
        h = (1.0 - z) * n + z * h
        ref_h.append(h)
        logits = jnp.dot(h.astype(jnp.bfloat16), w_lin,
                         preferred_element_type=jnp.float32) + b_lin
        m = jnp.max(logits, axis=-1, keepdims=True)
        sh = logits - m
        lse = jnp.log(jnp.sum(jnp.exp(sh), axis=-1, keepdims=True))
        ref_logp.append((sh - lse)[:, :output_size])
    ref_logp = jnp.stack(ref_logp, axis=0)                  # (3, 1, 18)

    assert log_probs.shape == (len(line), 1, output_size)
    assert hn.shape == (1, 1, hidden_size)
    assert jnp.allclose(log_probs, ref_logp, atol=1e-3), "log-probs mismatch"
    assert jnp.allclose(hn.reshape(1, H), ref_h[-1], atol=1e-3), "hidden mismatch"

    # Single-step call == the PyTorch module's forward(lineToTensor('B').squeeze(0), hidden).
    lp1, hn1 = gru_forward(x[0:1], hidden0, params)
    jax.block_until_ready((lp1, hn1))
    assert lp1.shape == (1, 1, output_size) and hn1.shape == (1, 1, hidden_size)
    assert jnp.allclose(lp1, ref_logp[0:1], atol=1e-3)
    assert jnp.allclose(hn1.reshape(1, H), ref_h[0], atol=1e-3)

    print("KERNEL_OK")
</pallas_src>

<mosaic_0001>
module attributes {stable_mosaic.version = 11 : i64} {
  func.func @gru_seq_kernel(%arg0: memref<3xi32, #tpu.memory_space<smem>>, %arg1: memref<1x128xf32, #tpu.memory_space<vmem>>, %arg2: memref<64x384xf32, #tpu.memory_space<vmem>>, %arg3: memref<128x384xbf16, #tpu.memory_space<vmem>>, %arg4: memref<1x384xf32, #tpu.memory_space<vmem>>, %arg5: memref<1x384xf32, #tpu.memory_space<vmem>>, %arg6: memref<128x128xbf16, #tpu.memory_space<vmem>>, %arg7: memref<1x128xf32, #tpu.memory_space<vmem>>, %arg8: memref<3x128xf32, #tpu.memory_space<vmem>>, %arg9: memref<1x128xf32, #tpu.memory_space<vmem>>, %arg10: memref<3x128xf32, #tpu.memory_space<vmem>>) attributes {dimension_semantics = [], scalar_prefetch = 0 : i64, scratch_operands = 1 : i64, tpu.core_type = #tpu.core_type<tc>} {
    %c0 = arith.constant 0 : index
    %c0_0 = arith.constant 0 : index
    %0 = vector.load %arg1[%c0, %c0_0] : memref<1x128xf32, #tpu.memory_space<vmem>>, vector<1x128xf32>
    %c0_i32 = arith.constant 0 : i32
    %1 = arith.index_cast %c0_i32 : i32 to index
    %2 = memref.load %arg0[%1] : memref<3xi32, #tpu.memory_space<smem>>
    %3 = arith.index_cast %2 : i32 to index
    %c0_1 = arith.constant 0 : index
    %4 = vector.load %arg2[%3, %c0_1] : memref<64x384xf32, #tpu.memory_space<vmem>>, vector<1x384xf32>
    %c0_2 = arith.constant 0 : index
    %c0_3 = arith.constant 0 : index
    %5 = vector.load %arg4[%c0_2, %c0_3] : memref<1x384xf32, #tpu.memory_space<vmem>>, vector<1x384xf32>
    %6 = arith.addf %4, %5 : vector<1x384xf32>
    %7 = arith.truncf %0 : vector<1x128xf32> to vector<1x128xbf16>
    %c0_4 = arith.constant 0 : index
    %c0_5 = arith.constant 0 : index
    %8 = vector.load %arg3[%c0_4, %c0_5] : memref<128x384xbf16, #tpu.memory_space<vmem>>, vector<128x384xbf16>
    %cst = arith.constant dense<0.000000e+00> : vector<1x384xf32>
    %9 = tpu.matmul %7, %8, %cst {dimension_numbers = #tpu.dot_dimension_numbers<[1], [0], [0], [1], [0, 0, 1, 1], [], []>} : vector<1x128xbf16>, vector<128x384xbf16>, vector<1x384xf32> -> vector<1x384xf32>
    %c0_6 = arith.constant 0 : index
    %c0_7 = arith.constant 0 : index
    %10 = vector.load %arg5[%c0_6, %c0_7] : memref<1x384xf32, #tpu.memory_space<vmem>>, vector<1x384xf32>
    %11 = arith.addf %9, %10 : vector<1x384xf32>
    %12 = vector.extract_strided_slice %6 {offsets = [0, 0], sizes = [1, 128], strides = [1, 1]} : vector<1x384xf32> to vector<1x128xf32>
    %13 = vector.extract_strided_slice %11 {offsets = [0, 0], sizes = [1, 128], strides = [1, 1]} : vector<1x384xf32> to vector<1x128xf32>
    %14 = arith.addf %12, %13 : vector<1x128xf32>
    %15 = arith.negf %14 : vector<1x128xf32>
    %16 = math.exp %15 : vector<1x128xf32>
    %cst_8 = arith.constant 1.000000e+00 : f32
    %17 = vector.broadcast %cst_8 : f32 to vector<1x128xf32>
    %18 = arith.addf %17, %16 : vector<1x128xf32>
    %19 = arith.divf %17, %18 : vector<1x128xf32>
    %20 = vector.extract_strided_slice %6 {offsets = [0, 128], sizes = [1, 128], strides = [1, 1]} : vector<1x384xf32> to vector<1x128xf32>
    %21 = vector.extract_strided_slice %11 {offsets = [0, 128], sizes = [1, 128], strides = [1, 1]} : vector<1x384xf32> to vector<1x128xf32>
    %22 = arith.addf %20, %21 : vector<1x128xf32>
    %23 = arith.negf %22 : vector<1x128xf32>
    %24 = math.exp %23 : vector<1x128xf32>
    %cst_9 = arith.constant 1.000000e+00 : f32
    %25 = vector.broadcast %cst_9 : f32 to vector<1x128xf32>
    %26 = arith.addf %25, %24 : vector<1x128xf32>
    %27 = arith.divf %25, %26 : vector<1x128xf32>
    %28 = vector.extract_strided_slice %6 {offsets = [0, 256], sizes = [1, 128], strides = [1, 1]} : vector<1x384xf32> to vector<1x128xf32>
    %29 = vector.extract_strided_slice %11 {offsets = [0, 256], sizes = [1, 128], strides = [1, 1]} : vector<1x384xf32> to vector<1x128xf32>
    %30 = arith.mulf %19, %29 : vector<1x128xf32>
    %31 = arith.addf %28, %30 : vector<1x128xf32>
    %32 = math.tanh %31 : vector<1x128xf32>
    %cst_10 = arith.constant 1.000000e+00 : f32
    %33 = vector.broadcast %cst_10 : f32 to vector<1x128xf32>
    %34 = arith.subf %33, %27 : vector<1x128xf32>
    %35 = arith.mulf %34, %32 : vector<1x128xf32>
    %36 = arith.mulf %27, %0 : vector<1x128xf32>
    %37 = arith.addf %35, %36 : vector<1x128xf32>
    %38 = arith.index_cast %c0_i32 : i32 to index
    %c0_11 = arith.constant 0 : index
    %39 = vector.load %arg10[%38, %c0_11] : memref<3x128xf32, #tpu.memory_space<vmem>>, vector<1x128xf32>
    tpu.vector_store %arg10[%38, %c0_11], %37 {strides = array<i32>} : memref<3x128xf32, #tpu.memory_space<vmem>>, vector<1x128xf32>,
    %c1_i32 = arith.constant 1 : i32
    %40 = arith.index_cast %c1_i32 : i32 to index
    %41 = memref.load %arg0[%40] : memref<3xi32, #tpu.memory_space<smem>>
    %42 = arith.index_cast %41 : i32 to index
    %c0_12 = arith.constant 0 : index
    %43 = vector.load %arg2[%42, %c0_12] : memref<64x384xf32, #tpu.memory_space<vmem>>, vector<1x384xf32>
    %c0_13 = arith.constant 0 : index
    %c0_14 = arith.constant 0 : index
    %44 = vector.load %arg4[%c0_13, %c0_14] : memref<1x384xf32, #tpu.memory_space<vmem>>, vector<1x384xf32>
    %45 = arith.addf %43, %44 : vector<1x384xf32>
    %46 = arith.truncf %37 : vector<1x128xf32> to vector<1x128xbf16>
    %c0_15 = arith.constant 0 : index
    %c0_16 = arith.constant 0 : index
    %47 = vector.load %arg3[%c0_15, %c0_16] : memref<128x384xbf16, #tpu.memory_space<vmem>>, vector<128x384xbf16>
    %cst_17 = arith.constant dense<0.000000e+00> : vector<1x384xf32>
    %48 = tpu.matmul %46, %47, %cst_17 {dimension_numbers = #tpu.dot_dimension_numbers<[1], [0], [0], [1], [0, 0, 1, 1], [], []>} : vector<1x128xbf16>, vector<128x384xbf16>, vector<1x384xf32> -> vector<1x384xf32>
    %c0_18 = arith.constant 0 : index
    %c0_19 = arith.constant 0 : index
    %49 = vector.load %arg5[%c0_18, %c0_19] : memref<1x384xf32, #tpu.memory_space<vmem>>, vector<1x384xf32>
    %50 = arith.addf %48, %49 : vector<1x384xf32>
    %51 = vector.extract_strided_slice %45 {offsets = [0, 0], sizes = [1, 128], strides = [1, 1]} : vector<1x384xf32> to vector<1x128xf32>
    %52 = vector.extract_strided_slice %50 {offsets = [0, 0], sizes = [1, 128], strides = [1, 1]} : vector<1x384xf32> to vector<1x128xf32>
    %53 = arith.addf %51, %52 : vector<1x128xf32>
    %54 = arith.negf %53 : vector<1x128xf32>
    %55 = math.exp %54 : vector<1x128xf32>
    %cst_20 = arith.constant 1.000000e+00 : f32
    %56 = vector.broadcast %cst_20 : f32 to vector<1x128xf32>
    %57 = arith.addf %56, %55 : vector<1x128xf32>
    %58 = arith.divf %56, %57 : vector<1x128xf32>
    %59 = vector.extract_strided_slice %45 {offsets = [0, 128], sizes = [1, 128], strides = [1, 1]} : vector<1x384xf32> to vector<1x128xf32>
    %60 = vector.extract_strided_slice %50 {offsets = [0, 128], sizes = [1, 128], strides = [1, 1]} : vector<1x384xf32> to vector<1x128xf32>
    %61 = arith.addf %59, %60 : vector<1x128xf32>
    %62 = arith.negf %61 : vector<1x128xf32>
    %63 = math.exp %62 : vector<1x128xf32>
    %cst_21 = arith.constant 1.000000e+00 : f32
    %64 = vector.broadcast %cst_21 : f32 to vector<1x128xf32>
    %65 = arith.addf %64, %63 : vector<1x128xf32>
    %66 = arith.divf %64, %65 : vector<1x128xf32>
    %67 = vector.extract_strided_slice %45 {offsets = [0, 256], sizes = [1, 128], strides = [1, 1]} : vector<1x384xf32> to vector<1x128xf32>
    %68 = vector.extract_strided_slice %50 {offsets = [0, 256], sizes = [1, 128], strides = [1, 1]} : vector<1x384xf32> to vector<1x128xf32>
    %69 = arith.mulf %58, %68 : vector<1x128xf32>
    %70 = arith.addf %67, %69 : vector<1x128xf32>
    %71 = math.tanh %70 : vector<1x128xf32>
    %cst_22 = arith.constant 1.000000e+00 : f32
    %72 = vector.broadcast %cst_22 : f32 to vector<1x128xf32>
    %73 = arith.subf %72, %66 : vector<1x128xf32>
    %74 = arith.mulf %73, %71 : vector<1x128xf32>
    %75 = arith.mulf %66, %37 : vector<1x128xf32>
    %76 = arith.addf %74, %75 : vector<1x128xf32>
    %77 = arith.index_cast %c1_i32 : i32 to index
    %c0_23 = arith.constant 0 : index
    %78 = vector.load %arg10[%77, %c0_23] : memref<3x128xf32, #tpu.memory_space<vmem>>, vector<1x128xf32>
    tpu.vector_store %arg10[%77, %c0_23], %76 {strides = array<i32>} : memref<3x128xf32, #tpu.memory_space<vmem>>, vector<1x128xf32>,
    %c2_i32 = arith.constant 2 : i32
    %79 = arith.index_cast %c2_i32 : i32 to index
    %80 = memref.load %arg0[%79] : memref<3xi32, #tpu.memory_space<smem>>
    %81 = arith.index_cast %80 : i32 to index
    %c0_24 = arith.constant 0 : index
    %82 = vector.load %arg2[%81, %c0_24] : memref<64x384xf32, #tpu.memory_space<vmem>>, vector<1x384xf32>
    %c0_25 = arith.constant 0 : index
    %c0_26 = arith.constant 0 : index
    %83 = vector.load %arg4[%c0_25, %c0_26] : memref<1x384xf32, #tpu.memory_space<vmem>>, vector<1x384xf32>
    %84 = arith.addf %82, %83 : vector<1x384xf32>
    %85 = arith.truncf %76 : vector<1x128xf32> to vector<1x128xbf16>
    %c0_27 = arith.constant 0 : index
    %c0_28 = arith.constant 0 : index
    %86 = vector.load %arg3[%c0_27, %c0_28] : memref<128x384xbf16, #tpu.memory_space<vmem>>, vector<128x384xbf16>
    %cst_29 = arith.constant dense<0.000000e+00> : vector<1x384xf32>
    %87 = tpu.matmul %85, %86, %cst_29 {dimension_numbers = #tpu.dot_dimension_numbers<[1], [0], [0], [1], [0, 0, 1, 1], [], []>} : vector<1x128xbf16>, vector<128x384xbf16>, vector<1x384xf32> -> vector<1x384xf32>
    %c0_30 = arith.constant 0 : index
    %c0_31 = arith.constant 0 : index
    %88 = vector.load %arg5[%c0_30, %c0_31] : memref<1x384xf32, #tpu.memory_space<vmem>>, vector<1x384xf32>
    %89 = arith.addf %87, %88 : vector<1x384xf32>
    %90 = vector.extract_strided_slice %84 {offsets = [0, 0], sizes = [1, 128], strides = [1, 1]} : vector<1x384xf32> to vector<1x128xf32>
    %91 = vector.extract_strided_slice %89 {offsets = [0, 0], sizes = [1, 128], strides = [1, 1]} : vector<1x384xf32> to vector<1x128xf32>
    %92 = arith.addf %90, %91 : vector<1x128xf32>
    %93 = arith.negf %92 : vector<1x128xf32>
    %94 = math.exp %93 : vector<1x128xf32>
    %cst_32 = arith.constant 1.000000e+00 : f32
    %95 = vector.broadcast %cst_32 : f32 to vector<1x128xf32>
    %96 = arith.addf %95, %94 : vector<1x128xf32>
    %97 = arith.divf %95, %96 : vector<1x128xf32>
    %98 = vector.extract_strided_slice %84 {offsets = [0, 128], sizes = [1, 128], strides = [1, 1]} : vector<1x384xf32> to vector<1x128xf32>
    %99 = vector.extract_strided_slice %89 {offsets = [0, 128], sizes = [1, 128], strides = [1, 1]} : vector<1x384xf32> to vector<1x128xf32>
    %100 = arith.addf %98, %99 : vector<1x128xf32>
    %101 = arith.negf %100 : vector<1x128xf32>
    %102 = math.exp %101 : vector<1x128xf32>
    %cst_33 = arith.constant 1.000000e+00 : f32
    %103 = vector.broadcast %cst_33 : f32 to vector<1x128xf32>
    %104 = arith.addf %103, %102 : vector<1x128xf32>
    %105 = arith.divf %103, %104 : vector<1x128xf32>
    %106 = vector.extract_strided_slice %84 {offsets = [0, 256], sizes = [1, 128], strides = [1, 1]} : vector<1x384xf32> to vector<1x128xf32>
    %107 = vector.extract_strided_slice %89 {offsets = [0, 256], sizes = [1, 128], strides = [1, 1]} : vector<1x384xf32> to vector<1x128xf32>
    %108 = arith.mulf %97, %107 : vector<1x128xf32>
    %109 = arith.addf %106, %108 : vector<1x128xf32>
    %110 = math.tanh %109 : vector<1x128xf32>
    %cst_34 = arith.constant 1.000000e+00 : f32
    %111 = vector.broadcast %cst_34 : f32 to vector<1x128xf32>
    %112 = arith.subf %111, %105 : vector<1x128xf32>
    %113 = arith.mulf %112, %110 : vector<1x128xf32>
    %114 = arith.mulf %105, %76 : vector<1x128xf32>
    %115 = arith.addf %113, %114 : vector<1x128xf32>
    %116 = arith.index_cast %c2_i32 : i32 to index
    %c0_35 = arith.constant 0 : index
    %117 = vector.load %arg10[%116, %c0_35] : memref<3x128xf32, #tpu.memory_space<vmem>>, vector<1x128xf32>
    tpu.vector_store %arg10[%116, %c0_35], %115 {strides = array<i32>} : memref<3x128xf32, #tpu.memory_space<vmem>>, vector<1x128xf32>,
    %c3_i32 = arith.constant 3 : i32
    %c0_36 = arith.constant 0 : index
    %c0_37 = arith.constant 0 : index
    %118 = vector.load %arg9[%c0_36, %c0_37] : memref<1x128xf32, #tpu.memory_space<vmem>>, vector<1x128xf32>
    tpu.vector_store %arg9[%c0_36, %c0_37], %115 {strides = array<i32>} : memref<1x128xf32, #tpu.memory_space<vmem>>, vector<1x128xf32>,
    %c0_38 = arith.constant 0 : index
    %c0_39 = arith.constant 0 : index
    %119 = vector.load %arg10[%c0_38, %c0_39] : memref<3x128xf32, #tpu.memory_space<vmem>>, vector<3x128xf32>
    %120 = arith.truncf %119 : vector<3x128xf32> to vector<3x128xbf16>
    %c0_40 = arith.constant 0 : index
    %c0_41 = arith.constant 0 : index
    %121 = vector.load %arg6[%c0_40, %c0_41] : memref<128x128xbf16, #tpu.memory_space<vmem>>, vector<128x128xbf16>
    %cst_42 = arith.constant dense<0.000000e+00> : vector<3x128xf32>
    %122 = tpu.matmul %120, %121, %cst_42 {dimension_numbers = #tpu.dot_dimension_numbers<[1], [0], [0], [1], [0, 0, 1, 1], [], []>} : vector<3x128xbf16>, vector<128x128xbf16>, vector<3x128xf32> -> vector<3x128xf32>
    %c0_43 = arith.constant 0 : index
    %c0_44 = arith.constant 0 : index
    %123 = vector.load %arg7[%c0_43, %c0_44] : memref<1x128xf32, #tpu.memory_space<vmem>>, vector<1x128xf32>
    %124 = vector.broadcast %123 : vector<1x128xf32> to vector<3x128xf32>
    %125 = arith.addf %122, %124 : vector<3x128xf32>
    %cst_45 = arith.constant dense<0xFF800000> : vector<3xf32>
    %126 = vector.multi_reduction <maximumf>, %125, %cst_45 [1] : vector<3x128xf32> to vector<3xf32>
    %127 = vector.shape_cast %126 : vector<3xf32> to vector<3x1xf32>
    %128 = vector.broadcast %127 : vector<3x1xf32> to vector<3x128xf32>
    %129 = arith.subf %125, %128 : vector<3x128xf32>
    %130 = math.exp %129 : vector<3x128xf32>
    %cst_46 = arith.constant dense<0.000000e+00> : vector<3xf32>
    %131 = vector.multi_reduction <add>, %130, %cst_46 [1] : vector<3x128xf32> to vector<3xf32>
    %132 = vector.shape_cast %131 : vector<3xf32> to vector<3x1xf32>
    %133 = math.log %132 : vector<3x1xf32>
    %134 = vector.broadcast %133 : vector<3x1xf32> to vector<3x128xf32>
    %135 = arith.subf %129, %134 : vector<3x128xf32>
    %c0_47 = arith.constant 0 : index
    %c0_48 = arith.constant 0 : index
    %136 = vector.load %arg8[%c0_47, %c0_48] : memref<3x128xf32, #tpu.memory_space<vmem>>, vector<3x128xf32>
    tpu.vector_store %arg8[%c0_47, %c0_48], %135 {strides = array<i32>} : memref<3x128xf32, #tpu.memory_space<vmem>>, vector<3x128xf32>,
    return
  }
}

</mosaic_0001>

<llo_original>
// kernel: tpu_custom_call.1
$region0: #{tpu_custom_call.1}
  #allocation0 [shape = 'u32[]', space=smem, size = 0x4, offset = 0x4, fixed_abs, tag = 'smem constant byte address 0x4 - core index']
  #allocation1 [shape = 'u32[144,128]{1,0:T(1,128)}', space=vmem, size = 0x12000, scoped, tag = 'internal scratch']
  #allocation2 [shape = 'f32[3,128]{1,0:T(4,128)}', space=vmem, size = 0x800, scoped, tag = 'scratch operand']
  %s0 = inlined_call_operand.hbm [shape: s32[3], index: 0, kind: input, shape index: {}]
  %s1 = inlined_call_operand.vmem [shape: f32[1,128], index: 1, kind: input, shape index: {}]
  %s2 = inlined_call_operand.hbm [shape: f32[64,384], index: 2, kind: input, shape index: {}]
  %s3 = inlined_call_operand.hbm [shape: bf16[128,384], index: 3, kind: input, shape index: {}]
  %s4 = inlined_call_operand.vmem [shape: f32[1,384], index: 4, kind: input, shape index: {}]
  %s5 = inlined_call_operand.vmem [shape: f32[1,384], index: 5, kind: input, shape index: {}]
  %s6 = inlined_call_operand.hbm [shape: bf16[128,128], index: 6, kind: input, shape index: {}]
  %s7 = inlined_call_operand.vmem [shape: f32[1,128], index: 7, kind: input, shape index: {}]
  %s8 = inlined_call_operand.hbm [shape: f32[3,128], index: 8, kind: output, shape index: {0}]
  %s9 = inlined_call_operand.hbm [shape: f32[1,128], index: 9, kind: output, shape index: {1}]
  %10 = xla_tuple %s8, %s9
  %s11 = sld [smem:[#allocation0]]
  $region66: #{tpu_custom_call.1} parent=0
    _
  %s13 = ssub.s32 1, %s11
  %s14 = scalar_select 0, %s13, %s11
  $region1: #{tpu_custom_call.1} parent=0
    #allocation3 [shape = 'u8[512]{0}', space=smem, size = 0x200, scoped, tag = 'input window, operand 0, single buffered']
    #allocation4 [shape = 's32[1]{0}', space=sflag, size = 0x4, scoped, tag = 'scoped memory for tpu_custom_call.1']
    #allocation5 [shape = 's32[1]{0}', space=sflag, size = 0x4, scoped, tag = 'scoped memory for tpu_custom_call.1']
    #allocation6 [shape = 's32[1]{0}', space=sflag, size = 0x4, scoped, tag = 'scoped memory for tpu_custom_call.1']
    #allocation7 [shape = 'u8[98304]{0}', space=vmem, size = 0x18000, scoped, tag = 'input window, operand 2, single buffered']
    #allocation8 [shape = 'u8[98304]{0}', space=vmem, size = 0x18000, scoped, tag = 'input window, operand 3, single buffered']
    #allocation9 [shape = 's32[1]{0}', space=sflag, size = 0x4, scoped, tag = 'scoped memory for tpu_custom_call.1']
    #allocation10 [shape = 'u8[32768]{0}', space=vmem, size = 0x8000, scoped, tag = 'input window, operand 6, single buffered']
    #allocation11 [shape = 'u8[2048]{0}', space=vmem, size = 0x800, scoped, tag = 'output window, operand 0, single buffered']
    #allocation12 [shape = 'u8[512]{0}', space=vmem, size = 0x400, scoped, tag = 'output window, operand 1, single buffered']
    #allocation13 [shape = 's32[1]{0}', space=sflag, size = 0x4, scoped, tag = 'scoped memory for tpu_custom_call.1']
    %15 = vsyncpa [#allocation6], 0
    %16 = vsyncpa [#allocation4], 0
    %17 = vsyncpa [#allocation9], 0
    %18 = vsyncpa [#allocation5], 0
    %19 = vsyncpa [#allocation13], 0
    // Predicated region
    $region2: #{tpu_custom_call.1} parent=1 // pred_check
      _
    $region3: #{tpu_custom_call.1} parent=1 // pred_check_branch
      %21 = sbr.rel (0) target = $region5
    $region4: #{tpu_custom_call.1} parent=1 // pred_region
      %s23 = ssub.s32 16, 16
      %24 = vsyncadd [#allocation6], %s23
      %27 = dma.hbm_to_smem %s0, 16, [#allocation3], [#allocation6]
    $region5: #{tpu_custom_call.1} parent=1 // pred_fallthru
      _
    // Predicated region
    $region6: #{tpu_custom_call.1} parent=1 // pred_check
      _
    $region7: #{tpu_custom_call.1} parent=1 // pred_check_branch
      %29 = sbr.rel (0) target = $region9
    $region8: #{tpu_custom_call.1} parent=1 // pred_region
      _
    $region9: #{tpu_custom_call.1} parent=1 // pred_fallthru
      _
    // Predicated region
    $region10: #{tpu_custom_call.1} parent=1 // pred_check
      _
    $region11: #{tpu_custom_call.1} parent=1 // pred_check_branch
      %31 = sbr.rel (0) target = $region13
    $region12: #{tpu_custom_call.1} parent=1 // pred_region
      %s33 = ssub.s32 3072, 3072
      %34 = vsyncadd [#allocation4], %s33
      %s35 = sshll.u32 [#allocation7], 4
      %s36 = int_to_ptr.vmem [resolvable:$true] %s35
      %41 = dma.hbm_to_vmem [thread:$0]  %s2, 3072, %s36, [#allocation4], 384, 384, 24
    $region13: #{tpu_custom_call.1} parent=1 // pred_fallthru
      _
    // Predicated region
    $region14: #{tpu_custom_call.1} parent=1 // pred_check
      _
    $region15: #{tpu_custom_call.1} parent=1 // pred_check_branch
      %43 = sbr.rel (0) target = $region17
    $region16: #{tpu_custom_call.1} parent=1 // pred_region
      %s45 = ssub.s32 3072, 3072
      %46 = vsyncadd [#allocation9], %s45
      %s47 = sshll.u32 [#allocation8], 4
      %s48 = int_to_ptr.vmem [resolvable:$true] %s47
      %53 = dma.hbm_to_vmem [thread:$0]  %s3, 3072, %s48, [#allocation9], 192, 192, 12
    $region17: #{tpu_custom_call.1} parent=1 // pred_fallthru
      _
    // Predicated region
    $region18: #{tpu_custom_call.1} parent=1 // pred_check
      _
    $region19: #{tpu_custom_call.1} parent=1 // pred_check_branch
      %55 = sbr.rel (0) target = $region21
    $region20: #{tpu_custom_call.1} parent=1 // pred_region
      _
    $region21: #{tpu_custom_call.1} parent=1 // pred_fallthru
      _
    // Predicated region
    $region22: #{tpu_custom_call.1} parent=1 // pred_check
      _
    $region23: #{tpu_custom_call.1} parent=1 // pred_check_branch
      %57 = sbr.rel (0) target = $region25
    $region24: #{tpu_custom_call.1} parent=1 // pred_region
      _
    $region25: #{tpu_custom_call.1} parent=1 // pred_fallthru
      _
    // Predicated region
    $region26: #{tpu_custom_call.1} parent=1 // pred_check
      _
    $region27: #{tpu_custom_call.1} parent=1 // pred_check_branch
      %59 = sbr.rel (0) target = $region29
    $region28: #{tpu_custom_call.1} parent=1 // pred_region
      %s61 = ssub.s32 1024, 1024
      %62 = vsyncadd [#allocation9], %s61
      %s63 = sshll.u32 [#allocation10], 4
      %s64 = int_to_ptr.vmem [resolvable:$true] %s63
      %69 = dma.hbm_to_vmem [thread:$0]  %s6, 1024, %s64, [#allocation9], 64, 64, 4
    $region29: #{tpu_custom_call.1} parent=1 // pred_fallthru
      _
    // Predicated region
    $region30: #{tpu_custom_call.1} parent=1 // pred_check
      _
    $region31: #{tpu_custom_call.1} parent=1 // pred_check_branch
      %71 = sbr.rel (0) target = $region33
    $region32: #{tpu_custom_call.1} parent=1 // pred_region
      _
    $region33: #{tpu_custom_call.1} parent=1 // pred_fallthru
      _
    // Predicated region
    $region34: #{tpu_custom_call.1} parent=1 // pred_check
      _
    $region35: #{tpu_custom_call.1} parent=1 // pred_check_branch
      %73 = sbr.rel (0) target = $region37
    $region36: #{tpu_custom_call.1} parent=1 // pred_region
      %74 = dma.done [#allocation6], 16
    $region37: #{tpu_custom_call.1} parent=1 // pred_fallthru
      _
    // Predicated region
    $region38: #{tpu_custom_call.1} parent=1 // pred_check
      _
    $region39: #{tpu_custom_call.1} parent=1 // pred_check_branch
      %76 = sbr.rel (0) target = $region41
    $region40: #{tpu_custom_call.1} parent=1 // pred_region
      %77 = dma.done [#allocation4], 3072
    $region41: #{tpu_custom_call.1} parent=1 // pred_fallthru
      _
    // Predicated region
    $region42: #{tpu_custom_call.1} parent=1 // pred_check
      _
    $region43: #{tpu_custom_call.1} parent=1 // pred_check_branch
      %79 = sbr.rel (0) target = $region45
    $region44: #{tpu_custom_call.1} parent=1 // pred_region
      %80 = dma.done [#allocation9], 3072
    $region45: #{tpu_custom_call.1} parent=1 // pred_fallthru
      _
    // Predicated region
    $region46: #{tpu_custom_call.1} parent=1 // pred_check
      _
    $region47: #{tpu_custom_call.1} parent=1 // pred_check_branch
      %82 = sbr.rel (0) target = $region49
    $region48: #{tpu_custom_call.1} parent=1 // pred_region
      %83 = dma.done [#allocation9], 1024
    $region49: #{tpu_custom_call.1} parent=1 // pred_fallthru
      _
    %84 = sfence
    %v86 = vld [vmem:[%s1] sm:$0x1]
    %s87 = sld [smem:[#allocation3]]
    %s88 = sshra.s32 %s87, 3
    %s89 = sand.u32 %s87, 7
    %s90 = sshra.s32 %s87, 3
    %s91 = sand.u32 %s87, 7
    %s92 = smul.u32 %s88, 3
    %s93 = smul.u32 %s92, 8
    %s94 = sadd.s32 %s93, %s91
    %s95 = scalar_lea.vmem [#allocation7], %s94
    %v96 = vld [vmem:[%s95] ss:$8 sm:$0x7]
    %v97 = vld [vmem:[%s4] sm:$0x7]
    %v98 = vadd.f32 %v96, %v97
    %v99 = vpack.c.bf16 %v86, %v86
    %v100 = vld [vmem:[#allocation8] sm:$0xff]
    %v101 = vld [vmem:[#allocation8 + $0x8] sm:$0xf]
    %v102 = vld [vmem:[#allocation8 + $0xc] sm:$0xff]
    %v103 = vld [vmem:[#allocation8 + $0x14] sm:$0xf]
    %v104 = vld [vmem:[#allocation8 + $0x18] sm:$0xff]
    %v105 = vld [vmem:[#allocation8 + $0x20] sm:$0xf]
    %v106 = vld [vmem:[#allocation8 + $0x24] sm:$0xff]
    %v107 = vld [vmem:[#allocation8 + $0x2c] sm:$0xf]
    %v108 = vld [vmem:[#allocation8 + $0x30] sm:$0xff]
    %v109 = vld [vmem:[#allocation8 + $0x38] sm:$0xf]
    %v110 = vld [vmem:[#allocation8 + $0x3c] sm:$0xff]
    %v111 = vld [vmem:[#allocation8 + $0x44] sm:$0xf]
    %v112 = vld [vmem:[#allocation8 + $0x48] sm:$0xff]
    %v113 = vld [vmem:[#allocation8 + $0x50] sm:$0xf]
    %v114 = vld [vmem:[#allocation8 + $0x54] sm:$0xff]
    %v115 = vld [vmem:[#allocation8 + $0x5c] sm:$0xf]
    %v116 = vld [vmem:[#allocation8 + $0x60] sm:$0xff]
    %v117 = vld [vmem:[#allocation8 + $0x68] sm:$0xf]
    %v118 = vld [vmem:[#allocation8 + $0x6c] sm:$0xff]
    %v119 = vld [vmem:[#allocation8 + $0x74] sm:$0xf]
    %v120 = vld [vmem:[#allocation8 + $0x78] sm:$0xff]
    %v121 = vld [vmem:[#allocation8 + $0x80] sm:$0xf]
    %v122 = vld [vmem:[#allocation8 + $0x84] sm:$0xff]
    %v123 = vld [vmem:[#allocation8 + $0x8c] sm:$0xf]
    %v124 = vld [vmem:[#allocation8 + $0x90] sm:$0xff]
    %v125 = vld [vmem:[#allocation8 + $0x98] sm:$0xf]
    %v126 = vld [vmem:[#allocation8 + $0x9c] sm:$0xff]
    %v127 = vld [vmem:[#allocation8 + $0xa4] sm:$0xf]
    %v128 = vld [vmem:[#allocation8 + $0xa8] sm:$0xff]
    %v129 = vld [vmem:[#allocation8 + $0xb0] sm:$0xf]
    %v130 = vld [vmem:[#allocation8 + $0xb4] sm:$0xff]
    %v131 = vld [vmem:[#allocation8 + $0xbc] sm:$0xf]
    %v132 = vld [vmem:[%s5] sm:$0x7]
    %v165 = vunpack.c.l.b16 %v100
    %v166 = vunpack.c.h.b16 %v100
    %v167 = vunpack.c.l.b16 %v101
    %v168 = vunpack.c.l.b16 %v102
    %v169 = vunpack.c.h.b16 %v102
    %v170 = vunpack.c.l.b16 %v103
    %v171 = vunpack.c.l.b16 %v104
    %v172 = vunpack.c.h.b16 %v104
    %v173 = vunpack.c.l.b16 %v105
    %v174 = vunpack.c.l.b16 %v106
    %v175 = vunpack.c.h.b16 %v106
    %v176 = vunpack.c.l.b16 %v107
    %v177 = vunpack.c.l.b16 %v108
    %v178 = vunpack.c.h.b16 %v108
    %v179 = vunpack.c.l.b16 %v109
    %v180 = vunpack.c.l.b16 %v110
    %v181 = vunpack.c.h.b16 %v110
    %v182 = vunpack.c.l.b16 %v111
    %v183 = vunpack.c.l.b16 %v112
    %v184 = vunpack.c.h.b16 %v112
    %v185 = vunpack.c.l.b16 %v113
    %v186 = vunpack.c.l.b16 %v114
    %v187 = vunpack.c.h.b16 %v114
    %v188 = vunpack.c.l.b16 %v115
    %v189 = vunpack.c.l.b16 %v116
    %v190 = vunpack.c.h.b16 %v116
    %v191 = vunpack.c.l.b16 %v117
    %v192 = vunpack.c.l.b16 %v118
    %v193 = vunpack.c.h.b16 %v118
    %v194 = vunpack.c.l.b16 %v119
    %v195 = vunpack.c.l.b16 %v120
    %v196 = vunpack.c.h.b16 %v120
    %v197 = vunpack.c.l.b16 %v121
    %v198 = vunpack.c.l.b16 %v122
    %v199 = vunpack.c.h.b16 %v122
    %v200 = vunpack.c.l.b16 %v123
    %v201 = vunpack.c.l.b16 %v124
    %v202 = vunpack.c.h.b16 %v124
    %v203 = vunpack.c.l.b16 %v125
    %v204 = vunpack.c.l.b16 %v126
    %v205 = vunpack.c.h.b16 %v126
    %v206 = vunpack.c.l.b16 %v127
    %v207 = vunpack.c.l.b16 %v128
    %v208 = vunpack.c.h.b16 %v128
    %v209 = vunpack.c.l.b16 %v129
    %v210 = vunpack.c.l.b16 %v130
    %v211 = vunpack.c.h.b16 %v130
    %v212 = vunpack.c.l.b16 %v131
    %v213 = vpack.c.b16 %v168, %v165
    %v214 = vpack.c.b16 %v169, %v166
    %v215 = vpack.c.b16 %v170, %v167
    %v216 = vpack.c.b16 %v174, %v171
    %v217 = vpack.c.b16 %v175, %v172
    %v218 = vpack.c.b16 %v176, %v173
    %v219 = vpack.c.b16 %v180, %v177
    %v220 = vpack.c.b16 %v181, %v178
    %v221 = vpack.c.b16 %v182, %v179
    %v222 = vpack.c.b16 %v186, %v183
    %v223 = vpack.c.b16 %v187, %v184
    %v224 = vpack.c.b16 %v188, %v185
    %v225 = vpack.c.b16 %v192, %v189
    %v226 = vpack.c.b16 %v193, %v190
    %v227 = vpack.c.b16 %v194, %v191
    %v228 = vpack.c.b16 %v198, %v195
    %v229 = vpack.c.b16 %v199, %v196
    %v230 = vpack.c.b16 %v200, %v197
    %v231 = vpack.c.b16 %v204, %v201
    %v232 = vpack.c.b16 %v205, %v202
    %v233 = vpack.c.b16 %v206, %v203
    %v234 = vpack.c.b16 %v210, %v207
    %v235 = vpack.c.b16 %v211, %v208
    %v236 = vpack.c.b16 %v212, %v209
    %v262 = vlaneseq
    %v263 = vshrl.u32 %v262, 7
    %v264 = vsub.s32 0, %v263
    %v265 = vrot.slane %v132, %v264
    %v266 = vlaneseq
    %v267 = vshrl.u32 %v266, 7
    %v268 = vsub.s32 1, %v267
    %v269 = vrot.slane %v132, %v268
    %v270 = vlaneseq
    %v271 = vshrl.u32 %v270, 7
    %v272 = vsub.s32 2, %v271
    %v273 = vrot.slane %v132, %v272
    %277 = vmatprep.subr.bf16.mxu0 %v235
    %278 = vmatpush1.bf16.msra.mxu0 %v234
    %279 = vmatprep.subr.bf16.mxu0 %v232
    %280 = vmatpush1.bf16.msra.mxu0 %v231
    %281 = vmatprep.subr.bf16.mxu0 %v229
    %282 = vmatpush1.bf16.msra.mxu0 %v228
    %283 = vmatprep.subr.bf16.mxu0 %v226
    %284 = vmatpush1.bf16.msra.mxu0 %v225
    %285 = vmatprep.subr.bf16.mxu0 %v223
    %286 = vmatpush1.bf16.msra.mxu0 %v222
    %287 = vmatprep.subr.bf16.mxu0 %v220
    %288 = vmatpush1.bf16.msra.mxu0 %v219
    %289 = vmatprep.subr.bf16.mxu0 %v217
    %290 = vmatpush1.bf16.msra.mxu0 %v216
    %291 = vmatprep.subr.bf16.mxu0 %v214
    %292 = vmatpush1.bf16.msra.mxu0 %v213
    %293 = vmatprep.subr.bf16.mxu0 0
    %294 = vmatpush2.bf16.msra.mxu0 0
    %295 = vmatprep.subr.bf16.mxu0 0
    %296 = vmatpush2.bf16.msra.mxu0 0
    %297 = vmatprep.subr.bf16.mxu0 0
    %298 = vmatpush2.bf16.msra.mxu0 0
    %299 = vmatprep.subr.bf16.mxu0 0
    %300 = vmatpush2.bf16.msra.mxu0 0
    %301 = vmatprep.subr.bf16.mxu0 0
    %302 = vmatpush2.bf16.msra.mxu0 0
    %303 = vmatprep.subr.bf16.mxu0 0
    %304 = vmatpush2.bf16.msra.mxu0 0
    %305 = vmatprep.subr.bf16.mxu0 0
    %306 = vmatpush2.bf16.msra.mxu0 0
    %307 = vmatprep.subr.bf16.mxu0 0
    %308 = vmatpush2.bf16.msra.mxu0 0
    %309 = vmatprep.mubr.bf16.mxu0 0
    %310 = vmatmul.mubr.bf16.gmra.mxu0 %v99
    %v311 = vpop.f32.mrf.mxu0
    %v312 = vadd.f32 %v265, %v311
    %v313 = vpop.f32.mrf.mxu0
    %v314 = vadd.f32 %v269, %v313
    %v315 = vpop.f32.mrf.mxu0
    %v316 = vpop.f32.mrf.mxu0
    %317 = vdwg.mxu0
    %318 = vmatprep.subr.bf16.mxu0 0
    %319 = vmatpush1.bf16.msra.mxu0 %v236
    %320 = vmatprep.subr.bf16.mxu0 0
    %321 = vmatpush1.bf16.msra.mxu0 %v233
    %322 = vmatprep.subr.bf16.mxu0 0
    %323 = vmatpush1.bf16.msra.mxu0 %v230
    %324 = vmatprep.subr.bf16.mxu0 0
    %325 = vmatpush1.bf16.msra.mxu0 %v227
    %326 = vmatprep.subr.bf16.mxu0 0
    %327 = vmatpush1.bf16.msra.mxu0 %v224
    %328 = vmatprep.subr.bf16.mxu0 0
    %329 = vmatpush1.bf16.msra.mxu0 %v221
    %330 = vmatprep.subr.bf16.mxu0 0
    %331 = vmatpush1.bf16.msra.mxu0 %v218
    %332 = vmatprep.subr.bf16.mxu0 0
    %333 = vmatpush1.bf16.msra.mxu0 %v215
    %334 = vmatprep.subr.bf16.mxu0 0
    %335 = vmatpush2.bf16.msra.mxu0 0
    %336 = vmatprep.subr.bf16.mxu0 0
    %337 = vmatpush2.bf16.msra.mxu0 0
    %338 = vmatprep.subr.bf16.mxu0 0
    %339 = vmatpush2.bf16.msra.mxu0 0
    %340 = vmatprep.subr.bf16.mxu0 0
    %341 = vmatpush2.bf16.msra.mxu0 0
    %342 = vmatprep.subr.bf16.mxu0 0
    %343 = vmatpush2.bf16.msra.mxu0 0
    %344 = vmatprep.subr.bf16.mxu0 0
    %345 = vmatpush2.bf16.msra.mxu0 0
    %346 = vmatprep.subr.bf16.mxu0 0
    %347 = vmatpush2.bf16.msra.mxu0 0
    %348 = vmatprep.subr.bf16.mxu0 0
    %349 = vmatpush2.bf16.msra.mxu0 0
    %350 = vmatprep.mubr.bf16.mxu0 0
    %351 = vmatmul.mubr.bf16.gmra.mxu0 %v99
    %v352 = vpop.f32.mrf.mxu0
    %v353 = vadd.f32 %v273, %v352
    %v354 = vpop.f32.mrf.mxu0
    %v355 = vpop.f32.mrf.mxu0
    %v356 = vpop.f32.mrf.mxu0
    %357 = vdwg.mxu0
    %v358 = vadd.f32 %v98, %v312
    %v359 = vxor.u32 %v358, 2147483648
    %v360 = vmul.f32 %v359, 1.442695
    %v361 = vpow.pop %v360
    %v362 = vadd.f32 %v361, 1.0
    %v363 = vrcp.pop %v362
    %v364 = vmul.f32 1.0, %v363
    %v366 = vrot.slane %v98, 1
    %v368 = vadd.f32 %v366, %v314
    %v369 = vxor.u32 %v368, 2147483648
    %v370 = vmul.f32 %v369, 1.442695
    %v371 = vpow.pop %v370
    %v372 = vadd.f32 %v371, 1.0
    %v373 = vrcp.pop %v372
    %v374 = vmul.f32 1.0, %v373
    %v375 = vmul.f32 %v364, %v353
    %v376 = vrot.slane %v98, 2
    %v378 = vadd.f32 %v376, %v375
    %v379 = vtanh.pop %v378
    %v380 = vsub.f32 1.0, %v374
    %v381 = vmul.f32 %v380, %v379
    %v382 = vmul.f32 %v374, %v86
    %v383 = vadd.f32 %v381, %v382
    %384 = vst [vmem:[#allocation2] sm:$0x1] %v383
    %s385 = sld [smem:[#allocation3 + $0x1]]
    %s386 = sshra.s32 %s385, 3
    %s387 = sand.u32 %s385, 7
    %s388 = sshra.s32 %s385, 3
    %s389 = sand.u32 %s385, 7
    %s390 = smul.u32 %s386, 3
    %s391 = smul.u32 %s390, 8
    %s392 = sadd.s32 %s391, %s389
    %s393 = scalar_lea.vmem [#allocation7], %s392
    %v394 = vld [vmem:[%s393] ss:$8 sm:$0x7]
    %v395 = vld [vmem:[%s4] sm:$0x7]
    %v396 = vadd.f32 %v394, %v395
    %v397 = vpack.c.bf16 %v383, %v383
    %v398 = vld [vmem:[#allocation8] sm:$0xff]
    %v399 = vld [vmem:[#allocation8 + $0x8] sm:$0xf]
    %v400 = vld [vmem:[#allocation8 + $0xc] sm:$0xff]
    %v401 = vld [vmem:[#allocation8 + $0x14] sm:$0xf]
    %v402 = vld [vmem:[#allocation8 + $0x18] sm:$0xff]
    %v403 = vld [vmem:[#allocation8 + $0x20] sm:$0xf]
    %v404 = vld [vmem:[#allocation8 + $0x24] sm:$0xff]
    %v405 = vld [vmem:[#allocation8 + $0x2c] sm:$0xf]
    %v406 = vld [vmem:[#allocation8 + $0x30] sm:$0xff]
    %v407 = vld [vmem:[#allocation8 + $0x38] sm:$0xf]
    %v408 = vld [vmem:[#allocation8 + $0x3c] sm:$0xff]
    %v409 = vld [vmem:[#allocation8 + $0x44] sm:$0xf]
    %v410 = vld [vmem:[#allocation8 + $0x48] sm:$0xff]
    %v411 = vld [vmem:[#allocation8 + $0x50] sm:$0xf]
    %v412 = vld [vmem:[#allocation8 + $0x54] sm:$0xff]
    %v413 = vld [vmem:[#allocation8 + $0x5c] sm:$0xf]
    %v414 = vld [vmem:[#allocation8 + $0x60] sm:$0xff]
    %v415 = vld [vmem:[#allocation8 + $0x68] sm:$0xf]
    %v416 = vld [vmem:[#allocation8 + $0x6c] sm:$0xff]
    %v417 = vld [vmem:[#allocation8 + $0x74] sm:$0xf]
    %v418 = vld [vmem:[#allocation8 + $0x78] sm:$0xff]
    %v419 = vld [vmem:[#allocation8 + $0x80] sm:$0xf]
    %v420 = vld [vmem:[#allocation8 + $0x84] sm:$0xff]
    %v421 = vld [vmem:[#allocation8 + $0x8c] sm:$0xf]
    %v422 = vld [vmem:[#allocation8 + $0x90] sm:$0xff]
    %v423 = vld [vmem:[#allocation8 + $0x98] sm:$0xf]
    %v424 = vld [vmem:[#allocation8 + $0x9c] sm:$0xff]
    %v425 = vld [vmem:[#allocation8 + $0xa4] sm:$0xf]
    %v426 = vld [vmem:[#allocation8 + $0xa8] sm:$0xff]
    %v427 = vld [vmem:[#allocation8 + $0xb0] sm:$0xf]
    %v428 = vld [vmem:[#allocation8 + $0xb4] sm:$0xff]
    %v429 = vld [vmem:[#allocation8 + $0xbc] sm:$0xf]
    %v430 = vld [vmem:[%s5] sm:$0x7]
    %v463 = vunpack.c.l.b16 %v398
    %v464 = vunpack.c.h.b16 %v398
    %v465 = vunpack.c.l.b16 %v399
    %v466 = vunpack.c.l.b16 %v400
    %v467 = vunpack.c.h.b16 %v400
    %v468 = vunpack.c.l.b16 %v401
    %v469 = vunpack.c.l.b16 %v402
    %v470 = vunpack.c.h.b16 %v402
    %v471 = vunpack.c.l.b16 %v403
    %v472 = vunpack.c.l.b16 %v404
    %v473 = vunpack.c.h.b16 %v404
    %v474 = vunpack.c.l.b16 %v405
    %v475 = vunpack.c.l.b16 %v406
    %v476 = vunpack.c.h.b16 %v406
    %v477 = vunpack.c.l.b16 %v407
    %v478 = vunpack.c.l.b16 %v408
    %v479 = vunpack.c.h.b16 %v408
    %v480 = vunpack.c.l.b16 %v409
    %v481 = vunpack.c.l.b16 %v410
    %v482 = vunpack.c.h.b16 %v410
    %v483 = vunpack.c.l.b16 %v411
    %v484 = vunpack.c.l.b16 %v412
    %v485 = vunpack.c.h.b16 %v412
    %v486 = vunpack.c.l.b16 %v413
    %v487 = vunpack.c.l.b16 %v414
    %v488 = vunpack.c.h.b16 %v414
    %v489 = vunpack.c.l.b16 %v415
    %v490 = vunpack.c.l.b16 %v416
    %v491 = vunpack.c.h.b16 %v416
    %v492 = vunpack.c.l.b16 %v417
    %v493 = vunpack.c.l.b16 %v418
    %v494 = vunpack.c.h.b16 %v418
    %v495 = vunpack.c.l.b16 %v419
    %v496 = vunpack.c.l.b16 %v420
    %v497 = vunpack.c.h.b16 %v420
    %v498 = vunpack.c.l.b16 %v421
    %v499 = vunpack.c.l.b16 %v422
    %v500 = vunpack.c.h.b16 %v422
    %v501 = vunpack.c.l.b16 %v423
    %v502 = vunpack.c.l.b16 %v424
    %v503 = vunpack.c.h.b16 %v424
    %v504 = vunpack.c.l.b16 %v425
    %v505 = vunpack.c.l.b16 %v426
    %v506 = vunpack.c.h.b16 %v426
    %v507 = vunpack.c.l.b16 %v427
    %v508 = vunpack.c.l.b16 %v428
    %v509 = vunpack.c.h.b16 %v428
    %v510 = vunpack.c.l.b16 %v429
    %v511 = vpack.c.b16 %v466, %v463
    %v512 = vpack.c.b16 %v467, %v464
    %v513 = vpack.c.b16 %v468, %v465
    %v514 = vpack.c.b16 %v472, %v469
    %v515 = vpack.c.b16 %v473, %v470
    %v516 = vpack.c.b16 %v474, %v471
    %v517 = vpack.c.b16 %v478, %v475
    %v518 = vpack.c.b16 %v479, %v476
    %v519 = vpack.c.b16 %v480, %v477
    %v520 = vpack.c.b16 %v484, %v481
    %v521 = vpack.c.b16 %v485, %v482
    %v522 = vpack.c.b16 %v486, %v483
    %v523 = vpack.c.b16 %v490, %v487
    %v524 = vpack.c.b16 %v491, %v488
    %v525 = vpack.c.b16 %v492, %v489
    %v526 = vpack.c.b16 %v496, %v493
    %v527 = vpack.c.b16 %v497, %v494
    %v528 = vpack.c.b16 %v498, %v495
    %v529 = vpack.c.b16 %v502, %v499
    %v530 = vpack.c.b16 %v503, %v500
    %v531 = vpack.c.b16 %v504, %v501
    %v532 = vpack.c.b16 %v508, %v505
    %v533 = vpack.c.b16 %v509, %v506
    %v534 = vpack.c.b16 %v510, %v507
    %v560 = vlaneseq
    %v561 = vshrl.u32 %v560, 7
    %v562 = vsub.s32 0, %v561
    %v563 = vrot.slane %v430, %v562
    %v564 = vlaneseq
    %v565 = vshrl.u32 %v564, 7
    %v566 = vsub.s32 1, %v565
    %v567 = vrot.slane %v430, %v566
    %v568 = vlaneseq
    %v569 = vshrl.u32 %v568, 7
    %v570 = vsub.s32 2, %v569
    %v571 = vrot.slane %v430, %v570
    %575 = vmatprep.subr.bf16.mxu0 %v533
    %576 = vmatpush1.bf16.msra.mxu0 %v532
    %577 = vmatprep.subr.bf16.mxu0 %v530
    %578 = vmatpush1.bf16.msra.mxu0 %v529
    %579 = vmatprep.subr.bf16.mxu0 %v527
    %580 = vmatpush1.bf16.msra.mxu0 %v526
    %581 = vmatprep.subr.bf16.mxu0 %v524
    %582 = vmatpush1.bf16.msra.mxu0 %v523
    %583 = vmatprep.subr.bf16.mxu0 %v521
    %584 = vmatpush1.bf16.msra.mxu0 %v520
    %585 = vmatprep.subr.bf16.mxu0 %v518
    %586 = vmatpush1.bf16.msra.mxu0 %v517
    %587 = vmatprep.subr.bf16.mxu0 %v515
    %588 = vmatpush1.bf16.msra.mxu0 %v514
    %589 = vmatprep.subr.bf16.mxu0 %v512
    %590 = vmatpush1.bf16.msra.mxu0 %v511
    %591 = vmatprep.subr.bf16.mxu0 0
    %592 = vmatpush2.bf16.msra.mxu0 0
    %593 = vmatprep.subr.bf16.mxu0 0
    %594 = vmatpush2.bf16.msra.mxu0 0
    %595 = vmatprep.subr.bf16.mxu0 0
    %596 = vmatpush2.bf16.msra.mxu0 0
    %597 = vmatprep.subr.bf16.mxu0 0
    %598 = vmatpush2.bf16.msra.mxu0 0
    %599 = vmatprep.subr.bf16.mxu0 0
    %600 = vmatpush2.bf16.msra.mxu0 0
    %601 = vmatprep.subr.bf16.mxu0 0
    %602 = vmatpush2.bf16.msra.mxu0 0
    %603 = vmatprep.subr.bf16.mxu0 0
    %604 = vmatpush2.bf16.msra.mxu0 0
    %605 = vmatprep.subr.bf16.mxu0 0
    %606 = vmatpush2.bf16.msra.mxu0 0
    %607 = vmatprep.mubr.bf16.mxu0 0
    %608 = vmatmul.mubr.bf16.gmra.mxu0 %v397
    %v609 = vpop.f32.mrf.mxu0
    %v610 = vadd.f32 %v563, %v609
    %v611 = vpop.f32.mrf.mxu0
    %v612 = vadd.f32 %v567, %v611
    %v613 = vpop.f32.mrf.mxu0
    %v614 = vpop.f32.mrf.mxu0
    %615 = vdwg.mxu0
    %616 = vmatprep.subr.bf16.mxu0 0
    %617 = vmatpush1.bf16.msra.mxu0 %v534
    %618 = vmatprep.subr.bf16.mxu0 0
    %619 = vmatpush1.bf16.msra.mxu0 %v531
    %620 = vmatprep.subr.bf16.mxu0 0
    %621 = vmatpush1.bf16.msra.mxu0 %v528
    %622 = vmatprep.subr.bf16.mxu0 0
    %623 = vmatpush1.bf16.msra.mxu0 %v525
    %624 = vmatprep.subr.bf16.mxu0 0
    %625 = vmatpush1.bf16.msra.mxu0 %v522
    %626 = vmatprep.subr.bf16.mxu0 0
    %627 = vmatpush1.bf16.msra.mxu0 %v519
    %628 = vmatprep.subr.bf16.mxu0 0
    %629 = vmatpush1.bf16.msra.mxu0 %v516
    %630 = vmatprep.subr.bf16.mxu0 0
    %631 = vmatpush1.bf16.msra.mxu0 %v513
    %632 = vmatprep.subr.bf16.mxu0 0
    %633 = vmatpush2.bf16.msra.mxu0 0
    %634 = vmatprep.subr.bf16.mxu0 0
    %635 = vmatpush2.bf16.msra.mxu0 0
    %636 = vmatprep.subr.bf16.mxu0 0
    %637 = vmatpush2.bf16.msra.mxu0 0
    %638 = vmatprep.subr.bf16.mxu0 0
    %639 = vmatpush2.bf16.msra.mxu0 0
    %640 = vmatprep.subr.bf16.mxu0 0
    %641 = vmatpush2.bf16.msra.mxu0 0
    %642 = vmatprep.subr.bf16.mxu0 0
    %643 = vmatpush2.bf16.msra.mxu0 0
    %644 = vmatprep.subr.bf16.mxu0 0
    %645 = vmatpush2.bf16.msra.mxu0 0
    %646 = vmatprep.subr.bf16.mxu0 0
    %647 = vmatpush2.bf16.msra.mxu0 0
    %648 = vmatprep.mubr.bf16.mxu0 0
    %649 = vmatmul.mubr.bf16.gmra.mxu0 %v397
    %v650 = vpop.f32.mrf.mxu0
    %v651 = vadd.f32 %v571, %v650
    %v652 = vpop.f32.mrf.mxu0
    %v653 = vpop.f32.mrf.mxu0
    %v654 = vpop.f32.mrf.mxu0
    %655 = vdwg.mxu0
    %v656 = vadd.f32 %v396, %v610
    %v657 = vxor.u32 %v656, 2147483648
    %v658 = vmul.f32 %v657, 1.442695
    %v659 = vpow.pop %v658
    %v660 = vadd.f32 %v659, 1.0
    %v661 = vrcp.pop %v660
    %v662 = vmul.f32 1.0, %v661
    %v664 = vrot.slane %v396, 1
    %v666 = vadd.f32 %v664, %v612
    %v667 = vxor.u32 %v666, 2147483648
    %v668 = vmul.f32 %v667, 1.442695
    %v669 = vpow.pop %v668
    %v670 = vadd.f32 %v669, 1.0
    %v671 = vrcp.pop %v670
    %v672 = vmul.f32 1.0, %v671
    %v673 = vmul.f32 %v662, %v651
    %v674 = vrot.slane %v396, 2
    %v676 = vadd.f32 %v674, %v673
    %v677 = vtanh.pop %v676
    %v678 = vsub.f32 1.0, %v672
    %v679 = vmul.f32 %v678, %v677
    %v680 = vmul.f32 %v672, %v383
    %v681 = vadd.f32 %v679, %v680
    %682 = vst [vmem:[#allocation2 + $0x1] sm:$0x1] %v681
    %s683 = sld [smem:[#allocation3 + $0x2]]
    %s684 = sshra.s32 %s683, 3
    %s685 = sand.u32 %s683, 7
    %s686 = sshra.s32 %s683, 3
    %s687 = sand.u32 %s683, 7
    %s688 = smul.u32 %s684, 3
    %s689 = smul.u32 %s688, 8
    %s690 = sadd.s32 %s689, %s687
    %s691 = scalar_lea.vmem [#allocation7], %s690
    %v692 = vld [vmem:[%s691] ss:$8 sm:$0x7]
    %v693 = vld [vmem:[%s4] sm:$0x7]
    %v694 = vadd.f32 %v692, %v693
    %v695 = vpack.c.bf16 %v681, %v681
    %v696 = vld [vmem:[#allocation8] sm:$0xff]
    %v697 = vld [vmem:[#allocation8 + $0x8] sm:$0xf]
    %v698 = vld [vmem:[#allocation8 + $0xc] sm:$0xff]
    %v699 = vld [vmem:[#allocation8 + $0x14] sm:$0xf]
    %v700 = vld [vmem:[#allocation8 + $0x18] sm:$0xff]
    %v701 = vld [vmem:[#allocation8 + $0x20] sm:$0xf]
    %v702 = vld [vmem:[#allocation8 + $0x24] sm:$0xff]
    %v703 = vld [vmem:[#allocation8 + $0x2c] sm:$0xf]
    %v704 = vld [vmem:[#allocation8 + $0x30] sm:$0xff]
    %v705 = vld [vmem:[#allocation8 + $0x38] sm:$0xf]
    %v706 = vld [vmem:[#allocation8 + $0x3c] sm:$0xff]
    %v707 = vld [vmem:[#allocation8 + $0x44] sm:$0xf]
    %v708 = vld [vmem:[#allocation8 + $0x48] sm:$0xff]
    %v709 = vld [vmem:[#allocation8 + $0x50] sm:$0xf]
    %v710 = vld [vmem:[#allocation8 + $0x54] sm:$0xff]
    %v711 = vld [vmem:[#allocation8 + $0x5c] sm:$0xf]
    %v712 = vld [vmem:[#allocation8 + $0x60] sm:$0xff]
    %v713 = vld [vmem:[#allocation8 + $0x68] sm:$0xf]
    %v714 = vld [vmem:[#allocation8 + $0x6c] sm:$0xff]
    %v715 = vld [vmem:[#allocation8 + $0x74] sm:$0xf]
    %v716 = vld [vmem:[#allocation8 + $0x78] sm:$0xff]
    %v717 = vld [vmem:[#allocation8 + $0x80] sm:$0xf]
    %v718 = vld [vmem:[#allocation8 + $0x84] sm:$0xff]
    %v719 = vld [vmem:[#allocation8 + $0x8c] sm:$0xf]
    %v720 = vld [vmem:[#allocation8 + $0x90] sm:$0xff]
    %v721 = vld [vmem:[#allocation8 + $0x98] sm:$0xf]
    %v722 = vld [vmem:[#allocation8 + $0x9c] sm:$0xff]
    %v723 = vld [vmem:[#allocation8 + $0xa4] sm:$0xf]
    %v724 = vld [vmem:[#allocation8 + $0xa8] sm:$0xff]
    %v725 = vld [vmem:[#allocation8 + $0xb0] sm:$0xf]
    %v726 = vld [vmem:[#allocation8 + $0xb4] sm:$0xff]
    %v727 = vld [vmem:[#allocation8 + $0xbc] sm:$0xf]
    %v728 = vld [vmem:[%s5] sm:$0x7]
    %v761 = vunpack.c.l.b16 %v696
    %v762 = vunpack.c.h.b16 %v696
    %v763 = vunpack.c.l.b16 %v697
    %v764 = vunpack.c.l.b16 %v698
    %v765 = vunpack.c.h.b16 %v698
    %v766 = vunpack.c.l.b16 %v699
    %v767 = vunpack.c.l.b16 %v700
    %v768 = vunpack.c.h.b16 %v700
    %v769 = vunpack.c.l.b16 %v701
    %v770 = vunpack.c.l.b16 %v702
    %v771 = vunpack.c.h.b16 %v702
    %v772 = vunpack.c.l.b16 %v703
    %v773 = vunpack.c.l.b16 %v704
    %v774 = vunpack.c.h.b16 %v704
    %v775 = vunpack.c.l.b16 %v705
    %v776 = vunpack.c.l.b16 %v706
    %v777 = vunpack.c.h.b16 %v706
    %v778 = vunpack.c.l.b16 %v707
    %v779 = vunpack.c.l.b16 %v708
    %v780 = vunpack.c.h.b16 %v708
    %v781 = vunpack.c.l.b16 %v709
    %v782 = vunpack.c.l.b16 %v710
    %v783 = vunpack.c.h.b16 %v710
    %v784 = vunpack.c.l.b16 %v711
    %v785 = vunpack.c.l.b16 %v712
    %v786 = vunpack.c.h.b16 %v712
    %v787 = vunpack.c.l.b16 %v713
    %v788 = vunpack.c.l.b16 %v714
    %v789 = vunpack.c.h.b16 %v714
    %v790 = vunpack.c.l.b16 %v715
    %v791 = vunpack.c.l.b16 %v716
    %v792 = vunpack.c.h.b16 %v716
    %v793 = vunpack.c.l.b16 %v717
    %v794 = vunpack.c.l.b16 %v718
    %v795 = vunpack.c.h.b16 %v718
    %v796 = vunpack.c.l.b16 %v719
    %v797 = vunpack.c.l.b16 %v720
    %v798 = vunpack.c.h.b16 %v720
    %v799 = vunpack.c.l.b16 %v721
    %v800 = vunpack.c.l.b16 %v722
    %v801 = vunpack.c.h.b16 %v722
    %v802 = vunpack.c.l.b16 %v723
    %v803 = vunpack.c.l.b16 %v724
    %v804 = vunpack.c.h.b16 %v724
    %v805 = vunpack.c.l.b16 %v725
    %v806 = vunpack.c.l.b16 %v726
    %v807 = vunpack.c.h.b16 %v726
    %v808 = vunpack.c.l.b16 %v727
    %v809 = vpack.c.b16 %v764, %v761
    %v810 = vpack.c.b16 %v765, %v762
    %v811 = vpack.c.b16 %v766, %v763
    %v812 = vpack.c.b16 %v770, %v767
    %v813 = vpack.c.b16 %v771, %v768
    %v814 = vpack.c.b16 %v772, %v769
    %v815 = vpack.c.b16 %v776, %v773
    %v816 = vpack.c.b16 %v777, %v774
    %v817 = vpack.c.b16 %v778, %v775
    %v818 = vpack.c.b16 %v782, %v779
    %v819 = vpack.c.b16 %v783, %v780
    %v820 = vpack.c.b16 %v784, %v781
    %v821 = vpack.c.b16 %v788, %v785
    %v822 = vpack.c.b16 %v789, %v786
    %v823 = vpack.c.b16 %v790, %v787
    %v824 = vpack.c.b16 %v794, %v791
    %v825 = vpack.c.b16 %v795, %v792
    %v826 = vpack.c.b16 %v796, %v793
    %v827 = vpack.c.b16 %v800, %v797
    %v828 = vpack.c.b16 %v801, %v798
    %v829 = vpack.c.b16 %v802, %v799
    %v830 = vpack.c.b16 %v806, %v803
    %v831 = vpack.c.b16 %v807, %v804
    %v832 = vpack.c.b16 %v808, %v805
    %v858 = vlaneseq
    %v859 = vshrl.u32 %v858, 7
    %v860 = vsub.s32 0, %v859
    %v861 = vrot.slane %v728, %v860
    %v862 = vlaneseq
    %v863 = vshrl.u32 %v862, 7
    %v864 = vsub.s32 1, %v863
    %v865 = vrot.slane %v728, %v864
    %v866 = vlaneseq
    %v867 = vshrl.u32 %v866, 7
    %v868 = vsub.s32 2, %v867
    %v869 = vrot.slane %v728, %v868
    %873 = vmatprep.subr.bf16.mxu0 %v831
    %874 = vmatpush1.bf16.msra.mxu0 %v830
    %875 = vmatprep.subr.bf16.mxu0 %v828
    %876 = vmatpush1.bf16.msra.mxu0 %v827
    %877 = vmatprep.subr.bf16.mxu0 %v825
    %878 = vmatpush1.bf16.msra.mxu0 %v824
    %879 = vmatprep.subr.bf16.mxu0 %v822
    %880 = vmatpush1.bf16.msra.mxu0 %v821
    %881 = vmatprep.subr.bf16.mxu0 %v819
    %882 = vmatpush1.bf16.msra.mxu0 %v818
    %883 = vmatprep.subr.bf16.mxu0 %v816
    %884 = vmatpush1.bf16.msra.mxu0 %v815
    %885 = vmatprep.subr.bf16.mxu0 %v813
    %886 = vmatpush1.bf16.msra.mxu0 %v812
    %887 = vmatprep.subr.bf16.mxu0 %v810
    %888 = vmatpush1.bf16.msra.mxu0 %v809
    %889 = vmatprep.subr.bf16.mxu0 0
    %890 = vmatpush2.bf16.msra.mxu0 0
    %891 = vmatprep.subr.bf16.mxu0 0
    %892 = vmatpush2.bf16.msra.mxu0 0
    %893 = vmatprep.subr.bf16.mxu0 0
    %894 = vmatpush2.bf16.msra.mxu0 0
    %895 = vmatprep.subr.bf16.mxu0 0
    %896 = vmatpush2.bf16.msra.mxu0 0
    %897 = vmatprep.subr.bf16.mxu0 0
    %898 = vmatpush2.bf16.msra.mxu0 0
    %899 = vmatprep.subr.bf16.mxu0 0
    %900 = vmatpush2.bf16.msra.mxu0 0
    %901 = vmatprep.subr.bf16.mxu0 0
    %902 = vmatpush2.bf16.msra.mxu0 0
    %903 = vmatprep.subr.bf16.mxu0 0
    %904 = vmatpush2.bf16.msra.mxu0 0
    %905 = vmatprep.mubr.bf16.mxu0 0
    %906 = vmatmul.mubr.bf16.gmra.mxu0 %v695
    %v907 = vpop.f32.mrf.mxu0
    %v908 = vadd.f32 %v861, %v907
    %v909 = vpop.f32.mrf.mxu0
    %v910 = vadd.f32 %v865, %v909
    %v911 = vpop.f32.mrf.mxu0
    %v912 = vpop.f32.mrf.mxu0
    %913 = vdwg.mxu0
    %914 = vmatprep.subr.bf16.mxu0 0
    %915 = vmatpush1.bf16.msra.mxu0 %v832
    %916 = vmatprep.subr.bf16.mxu0 0
    %917 = vmatpush1.bf16.msra.mxu0 %v829
    %918 = vmatprep.subr.bf16.mxu0 0
    %919 = vmatpush1.bf16.msra.mxu0 %v826
    %920 = vmatprep.subr.bf16.mxu0 0
    %921 = vmatpush1.bf16.msra.mxu0 %v823
    %922 = vmatprep.subr.bf16.mxu0 0
    %923 = vmatpush1.bf16.msra.mxu0 %v820
    %924 = vmatprep.subr.bf16.mxu0 0
    %925 = vmatpush1.bf16.msra.mxu0 %v817
    %926 = vmatprep.subr.bf16.mxu0 0
    %927 = vmatpush1.bf16.msra.mxu0 %v814
    %928 = vmatprep.subr.bf16.mxu0 0
    %929 = vmatpush1.bf16.msra.mxu0 %v811
    %930 = vmatprep.subr.bf16.mxu0 0
    %931 = vmatpush2.bf16.msra.mxu0 0
    %932 = vmatprep.subr.bf16.mxu0 0
    %933 = vmatpush2.bf16.msra.mxu0 0
    %934 = vmatprep.subr.bf16.mxu0 0
    %935 = vmatpush2.bf16.msra.mxu0 0
    %936 = vmatprep.subr.bf16.mxu0 0
    %937 = vmatpush2.bf16.msra.mxu0 0
    %938 = vmatprep.subr.bf16.mxu0 0
    %939 = vmatpush2.bf16.msra.mxu0 0
    %940 = vmatprep.subr.bf16.mxu0 0
    %941 = vmatpush2.bf16.msra.mxu0 0
    %942 = vmatprep.subr.bf16.mxu0 0
    %943 = vmatpush2.bf16.msra.mxu0 0
    %944 = vmatprep.subr.bf16.mxu0 0
    %945 = vmatpush2.bf16.msra.mxu0 0
    %946 = vmatprep.mubr.bf16.mxu0 0
    %947 = vmatmul.mubr.bf16.gmra.mxu0 %v695
    %v948 = vpop.f32.mrf.mxu0
    %v949 = vadd.f32 %v869, %v948
    %v950 = vpop.f32.mrf.mxu0
    %v951 = vpop.f32.mrf.mxu0
    %v952 = vpop.f32.mrf.mxu0
    %953 = vdwg.mxu0
    %v954 = vadd.f32 %v694, %v908
    %v955 = vxor.u32 %v954, 2147483648
    %v956 = vmul.f32 %v955, 1.442695
    %v957 = vpow.pop %v956
    %v958 = vadd.f32 %v957, 1.0
    %v959 = vrcp.pop %v958
    %v960 = vmul.f32 1.0, %v959
    %v962 = vrot.slane %v694, 1
    %v964 = vadd.f32 %v962, %v910
    %v965 = vxor.u32 %v964, 2147483648
    %v966 = vmul.f32 %v965, 1.442695
    %v967 = vpow.pop %v966
    %v968 = vadd.f32 %v967, 1.0
    %v969 = vrcp.pop %v968
    %v970 = vmul.f32 1.0, %v969
    %v971 = vmul.f32 %v960, %v949
    %v972 = vrot.slane %v694, 2
    %v974 = vadd.f32 %v972, %v971
    %v975 = vtanh.pop %v974
    %v976 = vsub.f32 1.0, %v970
    %v977 = vmul.f32 %v976, %v975
    %v978 = vmul.f32 %v970, %v681
    %v979 = vadd.f32 %v977, %v978
    %980 = vst [vmem:[#allocation2 + $0x2] sm:$0x1] %v979
    %981 = vst [vmem:[#allocation12] sm:$0x1] %v979
    %v982 = vld [vmem:[#allocation2] sm:$0x7]
    %v983 = vpack.c.bf16 %v982, %v982
    %v984 = vld [vmem:[#allocation10] sm:$0xf]
    %v985 = vld [vmem:[#allocation10 + $0x4] sm:$0xf]
    %v986 = vld [vmem:[#allocation10 + $0x8] sm:$0xf]
    %v987 = vld [vmem:[#allocation10 + $0xc] sm:$0xf]
    %v988 = vld [vmem:[#allocation10 + $0x10] sm:$0xf]
    %v989 = vld [vmem:[#allocation10 + $0x14] sm:$0xf]
    %v990 = vld [vmem:[#allocation10 + $0x18] sm:$0xf]
    %v991 = vld [vmem:[#allocation10 + $0x1c] sm:$0xf]
    %v992 = vld [vmem:[#allocation10 + $0x20] sm:$0xf]
    %v993 = vld [vmem:[#allocation10 + $0x24] sm:$0xf]
    %v994 = vld [vmem:[#allocation10 + $0x28] sm:$0xf]
    %v995 = vld [vmem:[#allocation10 + $0x2c] sm:$0xf]
    %v996 = vld [vmem:[#allocation10 + $0x30] sm:$0xf]
    %v997 = vld [vmem:[#allocation10 + $0x34] sm:$0xf]
    %v998 = vld [vmem:[#allocation10 + $0x38] sm:$0xf]
    %v999 = vld [vmem:[#allocation10 + $0x3c] sm:$0xf]
    %v1000 = vld [vmem:[%s7] sm:$0x1]
    %v1002 = vlaneseq
    %v1003 = vshrl.u32 %v1002, 7
    %v1004 = vsub.s32 0, %v1003
    %v1005 = vrot.slane %v1000, %v1004
    %v1023 = vunpack.c.l.b16 %v984
    %v1024 = vunpack.c.l.b16 %v985
    %v1025 = vunpack.c.l.b16 %v986
    %v1026 = vunpack.c.l.b16 %v987
    %v1027 = vunpack.c.l.b16 %v988
    %v1028 = vunpack.c.l.b16 %v989
    %v1029 = vunpack.c.l.b16 %v990
    %v1030 = vunpack.c.l.b16 %v991
    %v1031 = vunpack.c.l.b16 %v992
    %v1032 = vunpack.c.l.b16 %v993
    %v1033 = vunpack.c.l.b16 %v994
    %v1034 = vunpack.c.l.b16 %v995
    %v1035 = vunpack.c.l.b16 %v996
    %v1036 = vunpack.c.l.b16 %v997
    %v1037 = vunpack.c.l.b16 %v998
    %v1038 = vunpack.c.l.b16 %v999
    %v1039 = vpack.c.b16 %v1024, %v1023
    %v1040 = vpack.c.b16 %v1026, %v1025
    %v1041 = vpack.c.b16 %v1028, %v1027
    %v1042 = vpack.c.b16 %v1030, %v1029
    %v1043 = vpack.c.b16 %v1032, %v1031
    %v1044 = vpack.c.b16 %v1034, %v1033
    %v1045 = vpack.c.b16 %v1036, %v1035
    %v1046 = vpack.c.b16 %v1038, %v1037
    %1055 = vmatprep.subr.bf16.mxu0 0
    %1056 = vmatpush1.bf16.msra.mxu0 %v1046
    %1057 = vmatprep.subr.bf16.mxu0 0
    %1058 = vmatpush1.bf16.msra.mxu0 %v1045
    %1059 = vmatprep.subr.bf16.mxu0 0
    %1060 = vmatpush1.bf16.msra.mxu0 %v1044
    %1061 = vmatprep.subr.bf16.mxu0 0
    %1062 = vmatpush1.bf16.msra.mxu0 %v1043
    %1063 = vmatprep.subr.bf16.mxu0 0
    %1064 = vmatpush1.bf16.msra.mxu0 %v1042
    %1065 = vmatprep.subr.bf16.mxu0 0
    %1066 = vmatpush1.bf16.msra.mxu0 %v1041
    %1067 = vmatprep.subr.bf16.mxu0 0
    %1068 = vmatpush1.bf16.msra.mxu0 %v1040
    %1069 = vmatprep.subr.bf16.mxu0 0
    %1070 = vmatpush1.bf16.msra.mxu0 %v1039
    %1071 = vmatprep.subr.bf16.mxu0 0
    %1072 = vmatpush2.bf16.msra.mxu0 0
    %1073 = vmatprep.subr.bf16.mxu0 0
    %1074 = vmatpush2.bf16.msra.mxu0 0
    %1075 = vmatprep.subr.bf16.mxu0 0
    %1076 = vmatpush2.bf16.msra.mxu0 0
    %1077 = vmatprep.subr.bf16.mxu0 0
    %1078 = vmatpush2.bf16.msra.mxu0 0
    %1079 = vmatprep.subr.bf16.mxu0 0
    %1080 = vmatpush2.bf16.msra.mxu0 0
    %1081 = vmatprep.subr.bf16.mxu0 0
    %1082 = vmatpush2.bf16.msra.mxu0 0
    %1083 = vmatprep.subr.bf16.mxu0 0
    %1084 = vmatpush2.bf16.msra.mxu0 0
    %1085 = vmatprep.subr.bf16.mxu0 0
    %1086 = vmatpush2.bf16.msra.mxu0 0
    %1087 = vmatprep.mubr.bf16.mxu0 0
    %1088 = vmatmul.mubr.bf16.gmra.mxu0 %v983
    %v1089 = vpop.f32.mrf.mxu0
    %v1090 = vadd.f32 %v1005, %v1089
    %v1091 = vpop.f32.mrf.mxu0
    %v1092 = vpop.f32.mrf.mxu0
    %v1093 = vpop.f32.mrf.mxu0
    %1094 = vdwg.mxu0
    %vm1095 = vcmask 1042432
    %v1096 = vsel %vm1095, %v1090, -inf
    %1097 = vmax.xlane.f32.xlu0 %v1096
    %v1098 = vpop.xlane.xlu0 %1097
    %v1099 = vsub.f32 %v1090, %v1098
    %v1100 = vmul.f32 %v1099, 1.442695
    %v1101 = vpow.pop %v1100
    %v1102 = vsel %vm1095, %v1101, 0.0
    %1103 = vadd.xlane.f32.xlu0 %v1102
    %v1104 = vpop.xlane.xlu0 %1103
    %v1105 = vlog2.pop %v1104
    %v1106 = vmul.f32 %v1105, 0.6931472
    %v1107 = vsub.f32 %v1099, %v1106
    %1108 = vst [vmem:[#allocation11] sm:$0x7] %v1107
    // Predicated region
    $region50: #{tpu_custom_call.1} parent=1 // pred_check
      _
    $region51: #{tpu_custom_call.1} parent=1 // pred_check_branch
      %1110 = sbr.rel (0) target = $region53
    $region52: #{tpu_custom_call.1} parent=1 // pred_region
      %s1112 = ssub.s32 64, 64
      %1113 = vsyncadd [#allocation5], %s1112
      %s1115 = sshll.u32 [#allocation11], 4
      %s1116 = int_to_ptr.vmem [resolvable:$true] %s1115
      %1118 = dma.vmem_to_hbm [thread:$0]  %s1116, 64, %s8, [#allocation5]
    $region53: #{tpu_custom_call.1} parent=1 // pred_fallthru
      _
    // Predicated region
    $region54: #{tpu_custom_call.1} parent=1 // pred_check
      _
    $region55: #{tpu_custom_call.1} parent=1 // pred_check_branch
      %1120 = sbr.rel (0) target = $region57
    $region56: #{tpu_custom_call.1} parent=1 // pred_region
      %s1122 = ssub.s32 16, 16
      %1123 = vsyncadd [#allocation13], %s1122
      %s1125 = sshll.u32 [#allocation12], 4
      %s1126 = int_to_ptr.vmem [resolvable:$true] %s1125
      %1128 = dma.vmem_to_hbm [thread:$0]  %s1126, 16, %s9, [#allocation13]
    $region57: #{tpu_custom_call.1} parent=1 // pred_fallthru
      _
    // Predicated region
    $region58: #{tpu_custom_call.1} parent=1 // pred_check
      _
    $region59: #{tpu_custom_call.1} parent=1 // pred_check_branch
      %1130 = sbr.rel (0) target = $region61
    $region60: #{tpu_custom_call.1} parent=1 // pred_region
      %1131 = dma.done [#allocation5], 64
    $region61: #{tpu_custom_call.1} parent=1 // pred_fallthru
      _
    // Predicated region
    $region62: #{tpu_custom_call.1} parent=1 // pred_check
      _
    $region63: #{tpu_custom_call.1} parent=1 // pred_check_branch
      %1133 = sbr.rel (0) target = $region65
    $region64: #{tpu_custom_call.1} parent=1 // pred_region
      %1134 = dma.done [#allocation13], 16
    $region65: #{tpu_custom_call.1} parent=1 // pred_fallthru
      _
    %1135 = vsyncpa [#allocation4], 1
    %1136 = vsyncpa [#allocation9], 1
    %1137 = vsyncpa [#allocation5], 1
    %1138 = vsyncpa [#allocation13], 1
    %1139 = vsyncpa [#allocation6], 1

</llo_original>
